<compile_context>
chip_gen: v7x
topology: tpu7x:2x2x1
jax: 0.10.0
libtpu: 0.0.40
codegen_flags: <defaults>
</compile_context>

<pallas_src>
import jax
import jax.numpy as jnp
from jax.experimental import pallas as pl
from jax.experimental.pallas import tpu as pltpu

STATE_DIM = 4
ACTION_DIM = 2
HIDDEN_DIM = 24
NEG_SLOPE = 0.01  # PyTorch F.leaky_relu default negative_slope

# Padded / packed layout constants.
K1_PAD = 16     # state_dim padded to one bf16 sublane group (16 rows)
H_PAD = 128     # hidden dim padded to full lane width
OUT_PAD = 8     # action dim padded to 8 lanes (full last dim of the output array)

# Row offsets inside the packed bf16 weight slab (shape (W_ROWS, 128)).
# All offsets are multiples of 16 so bf16 slices are sublane-tile aligned.
_W1_OFF = 0                    # rows [0, 16)   : W1 padded (4x24 real)
_W2_OFF = _W1_OFF + K1_PAD     # rows [16, 144) : W2 padded (24x24 real)
_W3_OFF = _W2_OFF + H_PAD      # rows [144, 272): W3 padded (24x2 real)
W_ROWS = _W3_OFF + H_PAD       # 272 (multiple of 16)

B_ROWS = 8                     # f32 bias slab rows (b1, b2, b3 in rows 0..2)


def _leaky_relu(v):
    return jnp.where(v >= 0, v, NEG_SLOPE * v)


def _round_up(n, m):
    return ((n + m - 1) // m) * m


def dqn_kernel(x_ref, w_ref, b_ref, o_ref):
    # x_ref: (tile_b, K1_PAD) bf16 batch tile (zero-padded features/rows)
    # w_ref: (W_ROWS, 128) bf16 packed, zero-padded weights (grid-resident)
    # b_ref: (B_ROWS, 128) f32 packed, zero-padded biases (grid-resident)
    # o_ref: (tile_b, OUT_PAD) f32 output (2 real Q-values + 6 zero lanes)
    x = x_ref[...]
    w1 = w_ref[_W1_OFF:_W1_OFF + K1_PAD, :]
    w2 = w_ref[_W2_OFF:_W2_OFF + H_PAD, :]
    w3 = w_ref[_W3_OFF:_W3_OFF + H_PAD, :]
    b1 = b_ref[0:1, :]
    b2 = b_ref[1:2, :]
    b3 = b_ref[2:3, :]

    # bf16 MXU matmuls with f32 accumulation; bias add + leaky_relu in f32.
    # Zero padding is preserved exactly through every layer (leaky_relu(0) == 0).
    h = _leaky_relu(jnp.dot(x, w1, preferred_element_type=jnp.float32) + b1)
    h = h.astype(jnp.bfloat16)
    h = _leaky_relu(jnp.dot(h, w2, preferred_element_type=jnp.float32) + b2)
    h = h.astype(jnp.bfloat16)
    # NOTE: the PyTorch module applies LeakyReLU after fn3 as well; keep it.
    y = _leaky_relu(jnp.dot(h, w3, preferred_element_type=jnp.float32) + b3)
    o_ref[...] = y[:, :OUT_PAD].astype(o_ref.dtype)


def pack_params(params):
    """Pack (w1,b1,w2,b2,w3,b3) into a bf16 weight slab + f32 bias slab."""
    w1, b1, w2, b2, w3, b3 = params
    w_slab = jnp.zeros((W_ROWS, 128), jnp.float32)
    w_slab = w_slab.at[_W1_OFF:_W1_OFF + STATE_DIM, :HIDDEN_DIM].set(w1)
    w_slab = w_slab.at[_W2_OFF:_W2_OFF + HIDDEN_DIM, :HIDDEN_DIM].set(w2)
    w_slab = w_slab.at[_W3_OFF:_W3_OFF + HIDDEN_DIM, :ACTION_DIM].set(w3)
    w_slab = w_slab.astype(jnp.bfloat16)

    b_slab = jnp.zeros((B_ROWS, 128), jnp.float32)
    b_slab = b_slab.at[0, :HIDDEN_DIM].set(b1.reshape(-1))
    b_slab = b_slab.at[1, :HIDDEN_DIM].set(b2.reshape(-1))
    b_slab = b_slab.at[2, :ACTION_DIM].set(b3.reshape(-1))
    return w_slab, b_slab


def _choose_tiling(B, tile_max):
    """Pick (tile_b, Bp, n_steps) with <16 rows of padding per step."""
    n_steps = max(1, -(-B // tile_max))
    # v7x: guarantee >=2 grid steps once the batch is big enough, so the
    # "parallel" batch axis actually uses both TensorCores (no-op on v5e/v6e).
    if B >= 512:
        n_steps = max(n_steps, 2)
    tile_b = _round_up(-(-B // n_steps), 16)   # 16: bf16 sublane packing
    Bp = tile_b * n_steps
    return tile_b, Bp, n_steps


def dqn_forward(x, w_slab, b_slab, *, tile_max=1024):
    """x: (B, STATE_DIM) f32; slabs from pack_params. Returns (B, ACTION_DIM) f32."""
    B = x.shape[0]
    tile_b, Bp, n_steps = _choose_tiling(B, tile_max)

    # Pad batch to tile_b * n_steps and features to K1_PAD (zeros are exact),
    # and cast to bf16 for the MXU (halves x DMA bytes too).
    x_pad = jnp.zeros((Bp, K1_PAD), jnp.bfloat16).at[:B, :STATE_DIM].set(
        x.astype(jnp.bfloat16))

    out = pl.pallas_call(
        dqn_kernel,
        out_shape=jax.ShapeDtypeStruct((Bp, OUT_PAD), jnp.float32),
        grid=(n_steps,),
        in_specs=[
            # x: tiled over batch -> double-buffered input pipeline.
            pl.BlockSpec((tile_b, K1_PAD), lambda i: (i, 0)),
            # packed weights / biases: constant block index -> DMA'd once,
            # VMEM-resident across the whole grid.
            pl.BlockSpec((W_ROWS, 128), lambda i: (0, 0)),
            pl.BlockSpec((B_ROWS, 128), lambda i: (0, 0)),
        ],
        # Narrow (tile_b, 8) output block: 16x less HBM writeback than a
        # 128-lane-padded output slab.
        out_specs=pl.BlockSpec((tile_b, OUT_PAD), lambda i: (i, 0)),
        compiler_params=pltpu.CompilerParams(
            dimension_semantics=("parallel",),  # shard batch across TCs on v7x
        ),
    )(x_pad, w_slab, b_slab)

    return out[:B, :ACTION_DIM]


def init_params(key):
    # Deterministic synthetic init (uniform, akin to PyTorch's default Linear init).
    # Weights are stored as (in_features, out_features) so y = x @ W + b.
    def linear(key, fan_in, fan_out):
        kw, kb = jax.random.split(key)
        bound = 1.0 / jnp.sqrt(fan_in)
        w = jax.random.uniform(kw, (fan_in, fan_out), jnp.float32, -bound, bound)
        b = jax.random.uniform(kb, (fan_out,), jnp.float32, -bound, bound)
        return w, b

    k1, k2, k3 = jax.random.split(key, 3)
    w1, b1 = linear(k1, STATE_DIM, HIDDEN_DIM)
    w2, b2 = linear(k2, HIDDEN_DIM, HIDDEN_DIM)
    w3, b3 = linear(k3, HIDDEN_DIM, ACTION_DIM)
    return (w1, b1, w2, b2, w3, b3)


def reference_forward(x, params):
    """Full-f32 reference (the PyTorch module's math)."""
    w1, b1, w2, b2, w3, b3 = params
    h = _leaky_relu(x @ w1 + b1)
    h = _leaky_relu(h @ w2 + b2)
    return _leaky_relu(h @ w3 + b3)


if __name__ == "__main__":
    key = jax.random.PRNGKey(0)
    kx, kp = jax.random.split(key)

    params = init_params(kp)
    w_slab, b_slab = pack_params(params)

    # Tolerances are relaxed vs the f32 reference because matmul inputs are bf16
    # (f32 accumulation keeps the error small but not at 1e-5).
    TOL = dict(atol=5e-2, rtol=5e-2)

    # Small demo batch (matches the tiny DQN shapes) -> single grid step.
    batch = 8
    x = jax.random.normal(kx, (batch, STATE_DIM), jnp.float32)
    out = jax.block_until_ready(dqn_forward(x, w_slab, b_slab))
    ref = reference_forward(x, params)
    assert out.shape == (batch, ACTION_DIM)
    assert jnp.allclose(out, ref, **TOL)

    # Batch that is not a sublane multiple: exercises tight batch padding
    # (300 -> 304) and the resident-weight-slab path.
    x_big = jax.random.normal(kx, (300, STATE_DIM), jnp.float32)
    out_big = jax.block_until_ready(dqn_forward(x_big, w_slab, b_slab))
    ref_big = reference_forward(x_big, params)
    assert out_big.shape == (300, ACTION_DIM)
    assert jnp.allclose(out_big, ref_big, **TOL)

    # Batch >= 512: exercises the multi-step grid (>=2 steps so both v7x
    # TensorCores get work) and the pipelined x / output DMAs.
    x_huge = jax.random.normal(kx, (1500, STATE_DIM), jnp.float32)
    out_huge = jax.block_until_ready(dqn_forward(x_huge, w_slab, b_slab))
    ref_huge = reference_forward(x_huge, params)
    assert out_huge.shape == (1500, ACTION_DIM)
    assert jnp.allclose(out_huge, ref_huge, **TOL)

    print("KERNEL_OK")
</pallas_src>

<mosaic_0001>
module attributes {stable_mosaic.version = 11 : i64} {
  func.func @dqn_kernel(%arg0: i32, %arg1: memref<16x16xbf16, #tpu.memory_space<vmem>>, %arg2: memref<272x128xbf16, #tpu.memory_space<vmem>>, %arg3: memref<8x128xf32, #tpu.memory_space<vmem>>, %arg4: memref<16x8xf32, #tpu.memory_space<vmem>>) attributes {dimension_semantics = [#tpu.dimension_semantics<parallel>], iteration_bounds = array<i64: 1>, scalar_prefetch = 0 : i64, scratch_operands = 0 : i64, tpu.core_type = #tpu.core_type<tc>, window_params = [{transform_indices = @transform_0, window_bounds = array<i64: 16, 16>}, {pipeline_mode = #tpu.pipeline_mode<synchronous>, transform_indices = @transform_1, window_bounds = array<i64: 272, 128>}, {pipeline_mode = #tpu.pipeline_mode<synchronous>, transform_indices = @transform_2, window_bounds = array<i64: 8, 128>}, {transform_indices = @transform_3, window_bounds = array<i64: 16, 8>}]} {
    %c0 = arith.constant 0 : index
    %c0_0 = arith.constant 0 : index
    %0 = vector.load %arg1[%c0, %c0_0] : memref<16x16xbf16, #tpu.memory_space<vmem>>, vector<16x16xbf16>
    %c0_1 = arith.constant 0 : index
    %c0_2 = arith.constant 0 : index
    %1 = vector.load %arg2[%c0_1, %c0_2] : memref<272x128xbf16, #tpu.memory_space<vmem>>, vector<16x128xbf16>
    %c16 = arith.constant 16 : index
    %c0_3 = arith.constant 0 : index
    %2 = vector.load %arg2[%c16, %c0_3] : memref<272x128xbf16, #tpu.memory_space<vmem>>, vector<128x128xbf16>
    %c144 = arith.constant 144 : index
    %c0_4 = arith.constant 0 : index
    %3 = vector.load %arg2[%c144, %c0_4] : memref<272x128xbf16, #tpu.memory_space<vmem>>, vector<128x128xbf16>
    %c0_5 = arith.constant 0 : index
    %c0_6 = arith.constant 0 : index
    %4 = vector.load %arg3[%c0_5, %c0_6] : memref<8x128xf32, #tpu.memory_space<vmem>>, vector<1x128xf32>
    %c1 = arith.constant 1 : index
    %c0_7 = arith.constant 0 : index
    %5 = vector.load %arg3[%c1, %c0_7] : memref<8x128xf32, #tpu.memory_space<vmem>>, vector<1x128xf32>
    %c2 = arith.constant 2 : index
    %c0_8 = arith.constant 0 : index
    %6 = vector.load %arg3[%c2, %c0_8] : memref<8x128xf32, #tpu.memory_space<vmem>>, vector<1x128xf32>
    %cst = arith.constant dense<0.000000e+00> : vector<16x128xf32>
    %7 = tpu.matmul %0, %1, %cst {dimension_numbers = #tpu.dot_dimension_numbers<[1], [0], [0], [1], [0, 0, 1, 1], [], []>} : vector<16x16xbf16>, vector<16x128xbf16>, vector<16x128xf32> -> vector<16x128xf32>
    %8 = vector.broadcast %4 : vector<1x128xf32> to vector<16x128xf32>
    %9 = arith.addf %7, %8 : vector<16x128xf32>
    %cst_9 = arith.constant 0.000000e+00 : f32
    %10 = vector.broadcast %cst_9 : f32 to vector<16x128xf32>
    %11 = arith.cmpf oge, %9, %10 : vector<16x128xf32>
    %cst_10 = arith.constant 0.00999999977 : f32
    %12 = vector.broadcast %cst_10 : f32 to vector<16x128xf32>
    %13 = arith.mulf %12, %9 : vector<16x128xf32>
    %14 = arith.select %11, %9, %13 : vector<16x128xi1>, vector<16x128xf32>
    %15 = arith.truncf %14 : vector<16x128xf32> to vector<16x128xbf16>
    %cst_11 = arith.constant dense<0.000000e+00> : vector<16x128xf32>
    %16 = tpu.matmul %15, %2, %cst_11 {dimension_numbers = #tpu.dot_dimension_numbers<[1], [0], [0], [1], [0, 0, 1, 1], [], []>} : vector<16x128xbf16>, vector<128x128xbf16>, vector<16x128xf32> -> vector<16x128xf32>
    %17 = vector.broadcast %5 : vector<1x128xf32> to vector<16x128xf32>
    %18 = arith.addf %16, %17 : vector<16x128xf32>
    %cst_12 = arith.constant 0.000000e+00 : f32
    %19 = vector.broadcast %cst_12 : f32 to vector<16x128xf32>
    %20 = arith.cmpf oge, %18, %19 : vector<16x128xf32>
    %cst_13 = arith.constant 0.00999999977 : f32
    %21 = vector.broadcast %cst_13 : f32 to vector<16x128xf32>
    %22 = arith.mulf %21, %18 : vector<16x128xf32>
    %23 = arith.select %20, %18, %22 : vector<16x128xi1>, vector<16x128xf32>
    %24 = arith.truncf %23 : vector<16x128xf32> to vector<16x128xbf16>
    %cst_14 = arith.constant dense<0.000000e+00> : vector<16x128xf32>
    %25 = tpu.matmul %24, %3, %cst_14 {dimension_numbers = #tpu.dot_dimension_numbers<[1], [0], [0], [1], [0, 0, 1, 1], [], []>} : vector<16x128xbf16>, vector<128x128xbf16>, vector<16x128xf32> -> vector<16x128xf32>
    %26 = vector.broadcast %6 : vector<1x128xf32> to vector<16x128xf32>
    %27 = arith.addf %25, %26 : vector<16x128xf32>
    %cst_15 = arith.constant 0.000000e+00 : f32
    %28 = vector.broadcast %cst_15 : f32 to vector<16x128xf32>
    %29 = arith.cmpf oge, %27, %28 : vector<16x128xf32>
    %cst_16 = arith.constant 0.00999999977 : f32
    %30 = vector.broadcast %cst_16 : f32 to vector<16x128xf32>
    %31 = arith.mulf %30, %27 : vector<16x128xf32>
    %32 = arith.select %29, %27, %31 : vector<16x128xi1>, vector<16x128xf32>
    %33 = vector.extract_strided_slice %32 {offsets = [0, 0], sizes = [16, 8], strides = [1, 1]} : vector<16x128xf32> to vector<16x8xf32>
    %c0_17 = arith.constant 0 : index
    %c0_18 = arith.constant 0 : index
    %34 = vector.load %arg4[%c0_17, %c0_18] : memref<16x8xf32, #tpu.memory_space<vmem>>, vector<16x8xf32>
    tpu.vector_store %arg4[%c0_17, %c0_18], %33 {strides = array<i32>} : memref<16x8xf32, #tpu.memory_space<vmem>>, vector<16x8xf32>,
    return
  }
  func.func @transform_0(%arg0: i32) -> (i32, i32) {
    %c0_i32 = arith.constant 0 : i32
    %c0_i32_0 = arith.constant 0 : i32
    return %arg0, %c0_i32 : i32, i32
  }
  func.func @transform_1(%arg0: i32) -> (i32, i32) {
    %c0_i32 = arith.constant 0 : i32
    %c0_i32_0 = arith.constant 0 : i32
    %c0_i32_1 = arith.constant 0 : i32
    return %c0_i32, %c0_i32_0 : i32, i32
  }
  func.func @transform_2(%arg0: i32) -> (i32, i32) {
    %c0_i32 = arith.constant 0 : i32
    %c0_i32_0 = arith.constant 0 : i32
    %c0_i32_1 = arith.constant 0 : i32
    return %c0_i32, %c0_i32_0 : i32, i32
  }
  func.func @transform_3(%arg0: i32) -> (i32, i32) {
    %c0_i32 = arith.constant 0 : i32
    %c0_i32_0 = arith.constant 0 : i32
    return %arg0, %c0_i32 : i32, i32
  }
}

</mosaic_0001>

<llo_original>
// kernel: tpu_custom_call.1
$region0: #{tpu_custom_call.1}
  #allocation0 [shape = 'u32[]', space=smem, size = 0x4, offset = 0x4, fixed_abs, tag = 'smem constant byte address 0x4 - core index']
  #allocation1 [shape = 'u32[144,128]{1,0:T(1,128)}', space=vmem, size = 0x12000, scoped, tag = 'internal scratch']
  %s0 = inlined_call_operand.hbm [shape: bf16[16,16], index: 0, kind: input, shape index: {}]
  %s1 = inlined_call_operand.hbm [shape: bf16[272,128], index: 1, kind: input, shape index: {}]
  %s2 = inlined_call_operand.hbm [shape: f32[8,128], index: 2, kind: input, shape index: {}]
  %s3 = inlined_call_operand.vmem [shape: f32[16,8], index: 3, kind: output, shape index: {}]
  %s4 = sld [smem:[#allocation0]]
  $region34: #{tpu_custom_call.1} parent=0
    _
  %s6 = ssub.s32 1, %s4
  %s7 = scalar_select 0, %s6, %s4
  $region1: #{tpu_custom_call.1} parent=0
    #allocation2 [shape = 'u8[4096]{0}', space=vmem, size = 0x1000, scoped, tag = 'input window, operand 0, single buffered']
    #allocation3 [shape = 's32[1]{0}', space=sflag, size = 0x4, scoped, tag = 'scoped memory for tpu_custom_call.1']
    #allocation4 [shape = 'u8[69632]{0}', space=vmem, size = 0x11000, scoped, tag = 'input window, operand 1, single buffered']
    #allocation5 [shape = 's32[1]{0}', space=sflag, size = 0x4, scoped, tag = 'scoped memory for tpu_custom_call.1']
    #allocation6 [shape = 'u8[4096]{0}', space=vmem, size = 0x1000, scoped, tag = 'input window, operand 2, single buffered']
    %8 = vsyncpa [#allocation3], 0
    %9 = vsyncpa [#allocation5], 0
    // Predicated region
    $region2: #{tpu_custom_call.1} parent=1 // pred_check
      _
    $region3: #{tpu_custom_call.1} parent=1 // pred_check_branch
      %11 = sbr.rel (0) target = $region5
    $region4: #{tpu_custom_call.1} parent=1 // pred_region
      %s13 = ssub.s32 128, 128
      %14 = vsyncadd [#allocation3], %s13
      %s15 = sshll.u32 [#allocation2], 4
      %s16 = int_to_ptr.vmem [resolvable:$true] %s15
      %21 = dma.hbm_to_vmem [thread:$0]  %s0, 128, %s16, [#allocation3], 64, 64, 4
    $region5: #{tpu_custom_call.1} parent=1 // pred_fallthru
      _
    // Predicated region
    $region6: #{tpu_custom_call.1} parent=1 // pred_check
      _
    $region7: #{tpu_custom_call.1} parent=1 // pred_check_branch
      %23 = sbr.rel (0) target = $region9
    $region8: #{tpu_custom_call.1} parent=1 // pred_region
      %s25 = ssub.s32 2176, 2176
      %26 = vsyncadd [#allocation5], %s25
      %s27 = sshll.u32 [#allocation4], 4
      %s28 = int_to_ptr.vmem [resolvable:$true] %s27
      %33 = dma.hbm_to_vmem [thread:$0]  %s1, 2176, %s28, [#allocation5], 64, 64, 4
    $region9: #{tpu_custom_call.1} parent=1 // pred_fallthru
      _
    // Predicated region
    $region10: #{tpu_custom_call.1} parent=1 // pred_check
      _
    $region11: #{tpu_custom_call.1} parent=1 // pred_check_branch
      %35 = sbr.rel (0) target = $region13
    $region12: #{tpu_custom_call.1} parent=1 // pred_region
      %s37 = ssub.s32 128, 128
      %38 = vsyncadd [#allocation5], %s37
      %s40 = sshll.u32 [#allocation6], 4
      %s41 = int_to_ptr.vmem [resolvable:$true] %s40
      %43 = dma.hbm_to_vmem [thread:$0]  %s2, 128, %s41, [#allocation5]
    $region13: #{tpu_custom_call.1} parent=1 // pred_fallthru
      _
    // Predicated region
    $region14: #{tpu_custom_call.1} parent=1 // pred_check
      _
    $region15: #{tpu_custom_call.1} parent=1 // pred_check_branch
      %45 = sbr.rel (0) target = $region17
    $region16: #{tpu_custom_call.1} parent=1 // pred_region
      %46 = dma.done [#allocation3], 128
    $region17: #{tpu_custom_call.1} parent=1 // pred_fallthru
      _
    // Predicated region
    $region18: #{tpu_custom_call.1} parent=1 // pred_check
      _
    $region19: #{tpu_custom_call.1} parent=1 // pred_check_branch
      %48 = sbr.rel (0) target = $region21
    $region20: #{tpu_custom_call.1} parent=1 // pred_region
      %49 = dma.done [#allocation5], 2176
    $region21: #{tpu_custom_call.1} parent=1 // pred_fallthru
      _
    // Predicated region
    $region22: #{tpu_custom_call.1} parent=1 // pred_check
      _
    $region23: #{tpu_custom_call.1} parent=1 // pred_check_branch
      %51 = sbr.rel (0) target = $region25
    $region24: #{tpu_custom_call.1} parent=1 // pred_region
      %52 = dma.done [#allocation5], 128
    $region25: #{tpu_custom_call.1} parent=1 // pred_fallthru
      _
    %v54 = vld [vmem:[#allocation2] sm:$0xf]
    %v55 = vld [vmem:[#allocation2 + $0x4] sm:$0xf]
    %v56 = vld [vmem:[#allocation4] sm:$0xf]
    %v57 = vld [vmem:[#allocation4 + $0x4] sm:$0xf]
    %v58 = vld [vmem:[#allocation4 + $0x8] sm:$0xf]
    %v59 = vld [vmem:[#allocation4 + $0xc] sm:$0xf]
    %v60 = vld [vmem:[#allocation4 + $0x10] sm:$0xf]
    %v61 = vld [vmem:[#allocation4 + $0x14] sm:$0xf]
    %v62 = vld [vmem:[#allocation4 + $0x18] sm:$0xf]
    %v63 = vld [vmem:[#allocation4 + $0x1c] sm:$0xf]
    %v64 = vld [vmem:[#allocation4 + $0x20] sm:$0xf]
    %v65 = vld [vmem:[#allocation4 + $0x24] sm:$0xf]
    %v66 = vld [vmem:[#allocation4 + $0x28] sm:$0xf]
    %v67 = vld [vmem:[#allocation4 + $0x2c] sm:$0xf]
    %v68 = vld [vmem:[#allocation4 + $0x30] sm:$0xf]
    %v69 = vld [vmem:[#allocation4 + $0x34] sm:$0xf]
    %v70 = vld [vmem:[#allocation4 + $0x38] sm:$0xf]
    %v71 = vld [vmem:[#allocation4 + $0x3c] sm:$0xf]
    %v72 = vld [vmem:[#allocation4 + $0x40] sm:$0xf]
    %v73 = vld [vmem:[#allocation4 + $0x44] sm:$0xf]
    %v74 = vld [vmem:[#allocation4 + $0x48] sm:$0xf]
    %v75 = vld [vmem:[#allocation4 + $0x4c] sm:$0xf]
    %v76 = vld [vmem:[#allocation4 + $0x50] sm:$0xf]
    %v77 = vld [vmem:[#allocation4 + $0x54] sm:$0xf]
    %v78 = vld [vmem:[#allocation4 + $0x58] sm:$0xf]
    %v79 = vld [vmem:[#allocation4 + $0x5c] sm:$0xf]
    %v80 = vld [vmem:[#allocation4 + $0x60] sm:$0xf]
    %v81 = vld [vmem:[#allocation4 + $0x64] sm:$0xf]
    %v82 = vld [vmem:[#allocation4 + $0x68] sm:$0xf]
    %v83 = vld [vmem:[#allocation4 + $0x6c] sm:$0xf]
    %v84 = vld [vmem:[#allocation4 + $0x70] sm:$0xf]
    %v85 = vld [vmem:[#allocation4 + $0x74] sm:$0xf]
    %v86 = vld [vmem:[#allocation4 + $0x78] sm:$0xf]
    %v87 = vld [vmem:[#allocation4 + $0x7c] sm:$0xf]
    %v88 = vld [vmem:[#allocation4 + $0x80] sm:$0xf]
    %v89 = vld [vmem:[#allocation4 + $0x84] sm:$0xf]
    %v90 = vld [vmem:[#allocation6] sm:$0x1]
    %v91 = vld [vmem:[#allocation6 + $0x1] sm:$0x1]
    %v92 = vld [vmem:[#allocation6 + $0x2] sm:$0x1]
    %v93 = vlaneseq
    %v94 = vshrl.u32 %v93, 7
    %v95 = vsub.s32 0, %v94
    %v96 = vrot.slane %v90, %v95
    %v99 = vunpack.c.l.b16 %v54
    %v100 = vunpack.c.l.b16 %v55
    %v101 = vpack.c.b16 %v100, %v99
    %v104 = vunpack.c.l.b16 %v56
    %v105 = vunpack.c.l.b16 %v57
    %v106 = vpack.c.b16 %v105, %v104
    %vm108 = vcmask 130048
    %v110 = vsel %vm108, %v101, 0
    %112 = vmatprep.subr.bf16.mxu0 0
    %113 = vmatpush1.bf16.msra.mxu0 %v106
    %114 = vmatprep.subr.bf16.mxu0 0
    %115 = vmatpush1.bf16.msra.mxu0 0
    %116 = vmatprep.subr.bf16.mxu0 0
    %117 = vmatpush1.bf16.msra.mxu0 0
    %118 = vmatprep.subr.bf16.mxu0 0
    %119 = vmatpush1.bf16.msra.mxu0 0
    %120 = vmatprep.subr.bf16.mxu0 0
    %121 = vmatpush1.bf16.msra.mxu0 0
    %122 = vmatprep.subr.bf16.mxu0 0
    %123 = vmatpush1.bf16.msra.mxu0 0
    %124 = vmatprep.subr.bf16.mxu0 0
    %125 = vmatpush1.bf16.msra.mxu0 0
    %126 = vmatprep.subr.bf16.mxu0 0
    %127 = vmatpush1.bf16.msra.mxu0 0
    %128 = vmatprep.subr.bf16.mxu0 0
    %129 = vmatpush1.bf16.msra.mxu0 0
    %130 = vmatprep.subr.bf16.mxu0 0
    %131 = vmatpush1.bf16.msra.mxu0 0
    %132 = vmatprep.subr.bf16.mxu0 0
    %133 = vmatpush1.bf16.msra.mxu0 0
    %134 = vmatprep.subr.bf16.mxu0 0
    %135 = vmatpush1.bf16.msra.mxu0 0
    %136 = vmatprep.subr.bf16.mxu0 0
    %137 = vmatpush1.bf16.msra.mxu0 0
    %138 = vmatprep.subr.bf16.mxu0 0
    %139 = vmatpush1.bf16.msra.mxu0 0
    %140 = vmatprep.subr.bf16.mxu0 0
    %141 = vmatpush1.bf16.msra.mxu0 0
    %142 = vmatprep.subr.bf16.mxu0 0
    %143 = vmatpush1.bf16.msra.mxu0 0
    %144 = vmatprep.mubr.bf16.mxu0 0
    %145 = vmatmul.mubr.bf16.gmra.mrb[0].mxu0 %v110
    %v146 = vpop.f32.mrb[0].mxu0
    %v147 = vadd.f32 %v96, %v146
    %v148 = vpop.f32.mrb[0].mxu0
    %v149 = vpop.f32.mrb[0].mxu0
    %v150 = vadd.f32 %v96, %v149
    %v151 = vpop.f32.mrb[0].mxu0
    %152 = vdwg.mxu0
    %vm153 = vcmp.ge.f32.partialorder %v147, 0.0
    %vm154 = vcmp.ge.f32.partialorder %v150, 0.0
    %v155 = vmul.f32 %v147, 0.01
    %v156 = vmul.f32 %v150, 0.01
    %v157 = vsel %vm153, %v147, %v155
    %v158 = vsel %vm154, %v150, %v156
    %v159 = vpack.c.bf16 %v158, %v157
    %v160 = vlaneseq
    %v161 = vshrl.u32 %v160, 7
    %v162 = vsub.s32 0, %v161
    %v163 = vrot.slane %v91, %v162
    %v180 = vunpack.c.l.b16 %v58
    %v181 = vunpack.c.l.b16 %v59
    %v182 = vunpack.c.l.b16 %v60
    %v183 = vunpack.c.l.b16 %v61
    %v184 = vunpack.c.l.b16 %v62
    %v185 = vunpack.c.l.b16 %v63
    %v186 = vunpack.c.l.b16 %v64
    %v187 = vunpack.c.l.b16 %v65
    %v188 = vunpack.c.l.b16 %v66
    %v189 = vunpack.c.l.b16 %v67
    %v190 = vunpack.c.l.b16 %v68
    %v191 = vunpack.c.l.b16 %v69
    %v192 = vunpack.c.l.b16 %v70
    %v193 = vunpack.c.l.b16 %v71
    %v194 = vunpack.c.l.b16 %v72
    %v195 = vunpack.c.l.b16 %v73
    %v196 = vpack.c.b16 %v181, %v180
    %v197 = vpack.c.b16 %v183, %v182
    %v198 = vpack.c.b16 %v185, %v184
    %v199 = vpack.c.b16 %v187, %v186
    %v200 = vpack.c.b16 %v189, %v188
    %v201 = vpack.c.b16 %v191, %v190
    %v202 = vpack.c.b16 %v193, %v192
    %v203 = vpack.c.b16 %v195, %v194
    %212 = vmatprep.subr.bf16.mxu0 0
    %213 = vmatpush1.bf16.msra.mxu0 %v196
    %214 = vmatprep.subr.bf16.mxu0 0
    %215 = vmatpush1.bf16.msra.mxu0 %v197
    %216 = vmatprep.subr.bf16.mxu0 0
    %217 = vmatpush1.bf16.msra.mxu0 %v198
    %218 = vmatprep.subr.bf16.mxu0 0
    %219 = vmatpush1.bf16.msra.mxu0 %v199
    %220 = vmatprep.subr.bf16.mxu0 0
    %221 = vmatpush1.bf16.msra.mxu0 %v200
    %222 = vmatprep.subr.bf16.mxu0 0
    %223 = vmatpush1.bf16.msra.mxu0 %v201
    %224 = vmatprep.subr.bf16.mxu0 0
    %225 = vmatpush1.bf16.msra.mxu0 %v202
    %226 = vmatprep.subr.bf16.mxu0 0
    %227 = vmatpush1.bf16.msra.mxu0 %v203
    %228 = vmatprep.subr.bf16.mxu0 0
    %229 = vmatpush1.bf16.msra.mxu0 0
    %230 = vmatprep.subr.bf16.mxu0 0
    %231 = vmatpush1.bf16.msra.mxu0 0
    %232 = vmatprep.subr.bf16.mxu0 0
    %233 = vmatpush1.bf16.msra.mxu0 0
    %234 = vmatprep.subr.bf16.mxu0 0
    %235 = vmatpush1.bf16.msra.mxu0 0
    %236 = vmatprep.subr.bf16.mxu0 0
    %237 = vmatpush1.bf16.msra.mxu0 0
    %238 = vmatprep.subr.bf16.mxu0 0
    %239 = vmatpush1.bf16.msra.mxu0 0
    %240 = vmatprep.subr.bf16.mxu0 0
    %241 = vmatpush1.bf16.msra.mxu0 0
    %242 = vmatprep.subr.bf16.mxu0 0
    %243 = vmatpush1.bf16.msra.mxu0 0
    %244 = vmatprep.mubr.bf16.mxu0 0
    %245 = vmatmul.mubr.bf16.gmra.mrb[0].mxu0 %v159
    %v246 = vpop.f32.mrb[0].mxu0
    %v247 = vadd.f32 %v163, %v246
    %v248 = vpop.f32.mrb[0].mxu0
    %v249 = vpop.f32.mrb[0].mxu0
    %v250 = vadd.f32 %v163, %v249
    %v251 = vpop.f32.mrb[0].mxu0
    %252 = vdwg.mxu0
    %vm253 = vcmp.ge.f32.partialorder %v247, 0.0
    %vm254 = vcmp.ge.f32.partialorder %v250, 0.0
    %v255 = vmul.f32 %v247, 0.01
    %v256 = vmul.f32 %v250, 0.01
    %v257 = vsel %vm253, %v247, %v255
    %v258 = vsel %vm254, %v250, %v256
    %v259 = vpack.c.bf16 %v258, %v257
    %v260 = vlaneseq
    %v261 = vshrl.u32 %v260, 7
    %v262 = vsub.s32 0, %v261
    %v263 = vrot.slane %v92, %v262
    %v280 = vunpack.c.l.b16 %v74
    %v281 = vunpack.c.l.b16 %v75
    %v282 = vunpack.c.l.b16 %v76
    %v283 = vunpack.c.l.b16 %v77
    %v284 = vunpack.c.l.b16 %v78
    %v285 = vunpack.c.l.b16 %v79
    %v286 = vunpack.c.l.b16 %v80
    %v287 = vunpack.c.l.b16 %v81
    %v288 = vunpack.c.l.b16 %v82
    %v289 = vunpack.c.l.b16 %v83
    %v290 = vunpack.c.l.b16 %v84
    %v291 = vunpack.c.l.b16 %v85
    %v292 = vunpack.c.l.b16 %v86
    %v293 = vunpack.c.l.b16 %v87
    %v294 = vunpack.c.l.b16 %v88
    %v295 = vunpack.c.l.b16 %v89
    %v296 = vpack.c.b16 %v281, %v280
    %v297 = vpack.c.b16 %v283, %v282
    %v298 = vpack.c.b16 %v285, %v284
    %v299 = vpack.c.b16 %v287, %v286
    %v300 = vpack.c.b16 %v289, %v288
    %v301 = vpack.c.b16 %v291, %v290
    %v302 = vpack.c.b16 %v293, %v292
    %v303 = vpack.c.b16 %v295, %v294
    %312 = vmatprep.subr.bf16.mxu0 0
    %313 = vmatpush1.bf16.msra.mxu0 %v296
    %314 = vmatprep.subr.bf16.mxu0 0
    %315 = vmatpush1.bf16.msra.mxu0 %v297
    %316 = vmatprep.subr.bf16.mxu0 0
    %317 = vmatpush1.bf16.msra.mxu0 %v298
    %318 = vmatprep.subr.bf16.mxu0 0
    %319 = vmatpush1.bf16.msra.mxu0 %v299
    %320 = vmatprep.subr.bf16.mxu0 0
    %321 = vmatpush1.bf16.msra.mxu0 %v300
    %322 = vmatprep.subr.bf16.mxu0 0
    %323 = vmatpush1.bf16.msra.mxu0 %v301
    %324 = vmatprep.subr.bf16.mxu0 0
    %325 = vmatpush1.bf16.msra.mxu0 %v302
    %326 = vmatprep.subr.bf16.mxu0 0
    %327 = vmatpush1.bf16.msra.mxu0 %v303
    %328 = vmatprep.subr.bf16.mxu0 0
    %329 = vmatpush1.bf16.msra.mxu0 0
    %330 = vmatprep.subr.bf16.mxu0 0
    %331 = vmatpush1.bf16.msra.mxu0 0
    %332 = vmatprep.subr.bf16.mxu0 0
    %333 = vmatpush1.bf16.msra.mxu0 0
    %334 = vmatprep.subr.bf16.mxu0 0
    %335 = vmatpush1.bf16.msra.mxu0 0
    %336 = vmatprep.subr.bf16.mxu0 0
    %337 = vmatpush1.bf16.msra.mxu0 0
    %338 = vmatprep.subr.bf16.mxu0 0
    %339 = vmatpush1.bf16.msra.mxu0 0
    %340 = vmatprep.subr.bf16.mxu0 0
    %341 = vmatpush1.bf16.msra.mxu0 0
    %342 = vmatprep.subr.bf16.mxu0 0
    %343 = vmatpush1.bf16.msra.mxu0 0
    %344 = vmatprep.mubr.bf16.mxu0 0
    %345 = vmatmul.mubr.bf16.gmra.mrb[0].mxu0 %v259
    %v346 = vpop.f32.mrb[0].mxu0
    %v347 = vadd.f32 %v263, %v346
    %v348 = vpop.f32.mrb[0].mxu0
    %v349 = vpop.f32.mrb[0].mxu0
    %v350 = vadd.f32 %v263, %v349
    %v351 = vpop.f32.mrb[0].mxu0
    %352 = vdwg.mxu0
    %vm353 = vcmp.ge.f32.partialorder %v347, 0.0
    %vm354 = vcmp.ge.f32.partialorder %v350, 0.0
    %v355 = vmul.f32 %v347, 0.01
    %v356 = vmul.f32 %v350, 0.01
    %v357 = vsel %vm353, %v347, %v355
    %v358 = vsel %vm354, %v350, %v356
    %vm359 = vcmask 64512
    %360 = vst.msk [vmem:[%s3] sm:$0xff] %vm359, %v357
    %361 = vst.msk [vmem:[%s3 + $0x8] sm:$0xff] %vm359, %v358
    // Predicated region
    $region26: #{tpu_custom_call.1} parent=1 // pred_check
      _
    $region27: #{tpu_custom_call.1} parent=1 // pred_check_branch
      %363 = sbr.rel (0) target = $region29
    $region28: #{tpu_custom_call.1} parent=1 // pred_region
      _
    $region29: #{tpu_custom_call.1} parent=1 // pred_fallthru
      _
    // Predicated region
    $region30: #{tpu_custom_call.1} parent=1 // pred_check
      _
    $region31: #{tpu_custom_call.1} parent=1 // pred_check_branch
      %365 = sbr.rel (0) target = $region33
    $region32: #{tpu_custom_call.1} parent=1 // pred_region
      _
    $region33: #{tpu_custom_call.1} parent=1 // pred_fallthru
      _
    %366 = vsyncpa [#allocation3], 1
    %367 = vsyncpa [#allocation5], 1

</llo_original>
